<compile_context>
chip_gen: v7x
topology: tpu7x:2x2x1
jax: 0.10.0
libtpu: 0.0.40
codegen_flags: <defaults>
</compile_context>

<pallas_src>
import functools

import jax
import jax.numpy as jnp
from jax.experimental import pallas as pl
from jax.experimental.pallas import tpu as pltpu

_COMPUTE_DTYPE = jnp.bfloat16      # MXU operand dtype
_CONV_STORE_DTYPE = jnp.bfloat16   # resident conv-activation scratch dtype


def _round_up(a, b):
    return ((a + b - 1) // b) * b


def _vmem_budget_bytes():
    """Generation-aware VMEM ceiling: ~75% of physical (96 MiB on v5e/v6e, 48 MiB on v7x)."""
    cap = 64 * 1024 * 1024  # conservative fallback (v7x per-core physical VMEM)
    try:
        info = pltpu.get_tpu_info()
        c = getattr(info, "vmem_capacity_bytes", None)
        if c:
            cap = int(c)
    except Exception:
        pass
    return max(32 * 1024 * 1024, (3 * cap) // 4)


# ----------------------------------------------------------------------------
# Fused kernel: phase 0 = conv matmul + BN statistics, phase 1 = BN + ReLU
# ----------------------------------------------------------------------------
def _fused_conv_bn_relu_kernel(pt_ref, wt_ref, gamma_ref, beta_ref, out_ref,
                               conv_buf, sum_buf, ssq_buf, *, tm, mp, inv_m, eps):
    ph = pl.program_id(0)       # 0: conv + stats, 1: BN apply + ReLU
    img = pl.program_id(1)      # image (batch) index
    i = pl.program_id(2)        # per-image M-tile index
    off = pl.multiple_of(img * mp + i * tm, 128)   # lane offset into conv_buf

    @pl.when(ph == 0)
    def _conv_and_stats():
        @pl.when((img == 0) & (i == 0))
        def _init():
            sum_buf[...] = jnp.zeros_like(sum_buf)
            ssq_buf[...] = jnp.zeros_like(ssq_buf)

        # (c_out, K) @ (K, tm) on the MXU, bf16 operands, f32 accumulation,
        # lane-dense output.
        conv = jnp.dot(wt_ref[...], pt_ref[...],
                       preferred_element_type=jnp.float32)
        conv_buf[:, pl.ds(off, tm)] = conv.astype(conv_buf.dtype)
        # Zero-padded M columns (no conv bias) contribute exactly 0 to the stats.
        sum_buf[...] = sum_buf[...] + jnp.sum(conv, axis=1, keepdims=True)
        ssq_buf[...] = ssq_buf[...] + jnp.sum(conv * conv, axis=1, keepdims=True)

    @pl.when(ph == 1)
    def _bn_relu():
        # Training-mode BatchNorm: biased batch variance over (N,H,W) per channel.
        # Clamp var >= 0: E[x^2]-E[x]^2 can cancel slightly negative in f32.
        mean = sum_buf[...] * inv_m
        var = jnp.maximum(ssq_buf[...] * inv_m - mean * mean, 0.0)
        scale = gamma_ref[...] * jax.lax.rsqrt(var + eps)
        shift = beta_ref[...] - mean * scale
        conv = conv_buf[:, pl.ds(off, tm)].astype(jnp.float32)
        out_ref[...] = jnp.maximum(conv * scale + shift, 0.0)


# ----------------------------------------------------------------------------
# Wrapper
# ----------------------------------------------------------------------------
@functools.partial(jax.jit, static_argnames=("stride", "padding", "eps"))
def conv_module_forward(x, w, bias, gamma, beta, *, stride, padding, eps=1e-5):
    """x: (N, C_in, H, W) f32.  w: (C_out, C_in, kH, kW).  Returns NCHW f32."""
    del bias  # conv bias cancels exactly under training-mode (batch-stats) BatchNorm
    n, c_in, h, w_in = x.shape
    c_out, _, kh, kw = w.shape
    s, p = stride, padding
    oh = (h + 2 * p - kh) // s + 1
    ow = (w_in + 2 * p - kw) // s + 1
    kdim = kh * kw * c_in
    m_img = oh * ow                                  # per-image output pixels

    # ---- tile size from the generation-aware VMEM budget ---------------------
    budget = _vmem_budget_bytes()
    conv_isz = jnp.dtype(_CONV_STORE_DTYPE).itemsize
    in_isz = jnp.dtype(_COMPUTE_DTYPE).itemsize
    cap = min(8192, _round_up(m_img, 128))
    tm, mp = None, None
    t = cap
    while t >= 128:
        mp_t = _round_up(m_img, t)
        need = (c_out * n * mp_t * conv_isz          # resident conv activation
                + 2 * kdim * t * in_isz              # double-buffered patch tile
                + c_out * kdim * in_isz              # weights
                + 2 * c_out * t * 4                  # double-buffered output tile
                + (1 << 16))                         # slack
        if need <= budget:
            tm, mp = t, mp_t
            break
        t -= 128
    if tm is None:
        # TODO(synk): two-sweep HBM variant with per-tile partial stats for
        # activations that do not fit the fused VMEM path.
        raise NotImplementedError("activation too large for fused VMEM path")
    n_tiles = mp // tm

    # ---- glue: bf16 im2col in per-image (K, MP) layout ------------------------
    # TODO(synk): implicit GEMM (in-kernel halo DMAs per tap) would remove this
    # kH*kW-fold input expansion entirely.
    x_bf = x.astype(_COMPUTE_DTYPE)                  # cast BEFORE the expansion
    x_pad = jnp.pad(x_bf, ((0, 0), (0, 0), (p, p), (p, p)))
    cols = []
    for di in range(kh):
        for dj in range(kw):
            sl = x_pad[:, :, di:di + s * oh:s, dj:dj + s * ow:s]  # (n,c_in,oh,ow)
            cols.append(sl.reshape(n, c_in, m_img))
    patches = jnp.concatenate(cols, axis=1)                        # (n, kdim, m_img)
    patches = jnp.pad(patches, ((0, 0), (0, 0), (0, mp - m_img)))  # (n, kdim, mp)
    # weights: (C_out,C_in,kH,kW) -> (C_out,kH,kW,C_in) -> (C_out,K), rows (di,dj,c)
    w_t = jnp.transpose(w, (0, 2, 3, 1)).reshape(c_out, kdim).astype(_COMPUTE_DTYPE)
    gamma2 = gamma.astype(jnp.float32).reshape(c_out, 1)
    beta2 = beta.astype(jnp.float32).reshape(c_out, 1)

    out3d = pl.pallas_call(
        functools.partial(_fused_conv_bn_relu_kernel,
                          tm=tm, mp=mp, inv_m=1.0 / (n * m_img), eps=float(eps)),
        out_shape=jax.ShapeDtypeStruct((n, c_out, mp), jnp.float32),
        grid=(2, n, n_tiles),
        in_specs=[
            # phase 0 walks (image, tile); phase 1 pins the last already-resident
            # block so no patch DMA traffic is issued while applying BN.
            pl.BlockSpec((None, kdim, tm),
                         lambda ph, b, i: (b * (1 - ph) + (n - 1) * ph, 0,
                                           i * (1 - ph) + (n_tiles - 1) * ph)),
            pl.BlockSpec((c_out, kdim), lambda ph, b, i: (0, 0)),
            pl.BlockSpec((c_out, 1), lambda ph, b, i: (0, 0)),
            pl.BlockSpec((c_out, 1), lambda ph, b, i: (0, 0)),
        ],
        # all phase-0 steps map to output block (0,0,0) (never flushed until phase 1
        # overwrites it with real data); phase 1 sweeps the real output tiles.
        out_specs=pl.BlockSpec((None, c_out, tm),
                               lambda ph, b, i: (b * ph, 0, i * ph)),
        scratch_shapes=[
            pltpu.VMEM((c_out, n * mp), _CONV_STORE_DTYPE),  # resident conv activation
            pltpu.VMEM((c_out, 1), jnp.float32),             # per-channel sum
            pltpu.VMEM((c_out, 1), jnp.float32),             # per-channel sum of squares
        ],
        compiler_params=pltpu.CompilerParams(
            # stats accumulate serially into shared scratch -> all axes arbitrary.
            # TODO(synk): per-core partial stats would let (image, tile) go
            # "parallel" so v7x's two TensorCores split phase 0.
            dimension_semantics=("arbitrary", "arbitrary", "arbitrary"),
            vmem_limit_bytes=budget),
    )(patches, w_t, gamma2, beta2)

    # (N, C_out, MP) -> NCHW is a slice + reshape only (no extra HBM transpose).
    return out3d[:, :, :m_img].reshape(n, c_out, oh, ow)


# ----------------------------------------------------------------------------
# Pure-JAX reference (correctness check)
# ----------------------------------------------------------------------------
def _reference(x, w, b, gamma, beta, *, stride, padding, eps=1e-5):
    conv = jax.lax.conv_general_dilated(
        x, w, window_strides=(stride, stride),
        padding=[(padding, padding), (padding, padding)],
        dimension_numbers=("NCHW", "OIHW", "NCHW"),
        precision=jax.lax.Precision.HIGHEST,
    ) + b.reshape(1, -1, 1, 1)
    mean = jnp.mean(conv, axis=(0, 2, 3), keepdims=True)
    var = jnp.mean((conv - mean) ** 2, axis=(0, 2, 3), keepdims=True)
    y = (conv - mean) / jnp.sqrt(var + eps)
    y = y * gamma.reshape(1, -1, 1, 1) + beta.reshape(1, -1, 1, 1)
    return jnp.maximum(y, 0.0)


if __name__ == "__main__":
    # Conv_Module(c_in=4, c_out=8, k=3, s=1, p=1)
    c_in, c_out, k, s, p = 4, 8, 3, 1, 1
    n, h, wd = 2, 16, 16

    key = jax.random.PRNGKey(0)
    kx, kw_, kb, kg, kbe = jax.random.split(key, 5)
    x = jax.random.normal(kx, (n, c_in, h, wd), dtype=jnp.float32)
    w = jax.random.normal(kw_, (c_out, c_in, k, k), dtype=jnp.float32) * 0.1
    b = jax.random.normal(kb, (c_out,), dtype=jnp.float32) * 0.1
    gamma = 1.0 + 0.1 * jax.random.normal(kg, (c_out,), dtype=jnp.float32)
    beta = 0.1 * jax.random.normal(kbe, (c_out,), dtype=jnp.float32)

    out = conv_module_forward(x, w, b, gamma, beta, stride=s, padding=p)
    out = jax.block_until_ready(out)

    ref = _reference(x, w, b, gamma, beta, stride=s, padding=p)
    assert out.shape == ref.shape == (n, c_out, h, wd)
    # bf16 MXU operands + bf16 resident conv scratch (f32 accumulation / stats)
    # set the noise floor on the BN-normalized output; tolerance chosen accordingly.
    assert jnp.allclose(out, ref, atol=3e-2, rtol=3e-2)

    print("KERNEL_OK")
</pallas_src>

<mosaic_0001>
module attributes {stable_mosaic.version = 11 : i64} {
  func.func @_fused_conv_bn_relu_kernel(%arg0: i32, %arg1: i32, %arg2: i32, %arg3: memref<1x36x256xbf16, #tpu.memory_space<vmem>>, %arg4: memref<8x36xbf16, #tpu.memory_space<vmem>>, %arg5: memref<8x1xf32, #tpu.memory_space<vmem>>, %arg6: memref<8x1xf32, #tpu.memory_space<vmem>>, %arg7: memref<1x8x256xf32, #tpu.memory_space<vmem>>, %arg8: memref<8x512xbf16, #tpu.memory_space<vmem>>, %arg9: memref<8x1xf32, #tpu.memory_space<vmem>>, %arg10: memref<8x1xf32, #tpu.memory_space<vmem>>) attributes {dimension_semantics = [#tpu.dimension_semantics<arbitrary>, #tpu.dimension_semantics<arbitrary>, #tpu.dimension_semantics<arbitrary>], iteration_bounds = array<i64: 2, 2, 1>, scalar_prefetch = 0 : i64, scratch_operands = 3 : i64, tpu.core_type = #tpu.core_type<tc>, window_params = [{transform_indices = @transform_0, window_bounds = array<i64: 1, 36, 256>}, {pipeline_mode = #tpu.pipeline_mode<synchronous>, transform_indices = @transform_1, window_bounds = array<i64: 8, 36>}, {pipeline_mode = #tpu.pipeline_mode<synchronous>, transform_indices = @transform_2, window_bounds = array<i64: 8, 1>}, {pipeline_mode = #tpu.pipeline_mode<synchronous>, transform_indices = @transform_3, window_bounds = array<i64: 8, 1>}, {transform_indices = @transform_4, window_bounds = array<i64: 1, 8, 256>}]} {
    %c256_i32 = arith.constant 256 : i32
    %0 = arith.muli %arg1, %c256_i32 : i32
    %c256_i32_0 = arith.constant 256 : i32
    %1 = arith.muli %arg2, %c256_i32_0 : i32
    %2 = arith.addi %0, %1 : i32
    %3 = tpu.assume_multiple %2, 128 : i32
    %c0_i32 = arith.constant 0 : i32
    %4 = arith.cmpi eq, %arg0, %c0_i32 : i32
    %5 = arith.extui %4 : i1 to i32
    %c0_i32_1 = arith.constant 0 : i32
    %6 = arith.cmpi ne, %5, %c0_i32_1 : i32
    scf.if %6 {
      %c0_i32_3 = arith.constant 0 : i32
      %10 = arith.cmpi eq, %arg1, %c0_i32_3 : i32
      %c0_i32_4 = arith.constant 0 : i32
      %11 = arith.cmpi eq, %arg2, %c0_i32_4 : i32
      %12 = arith.andi %10, %11 : i1
      %13 = arith.extui %12 : i1 to i32
      %c0_i32_5 = arith.constant 0 : i32
      %14 = arith.cmpi ne, %13, %c0_i32_5 : i32
      scf.if %14 {
        %cst_21 = arith.constant 0.000000e+00 : f32
        %33 = vector.broadcast %cst_21 : f32 to vector<8x1xf32>
        %c0_22 = arith.constant 0 : index
        %c0_23 = arith.constant 0 : index
        %34 = vector.load %arg9[%c0_22, %c0_23] : memref<8x1xf32, #tpu.memory_space<vmem>>, vector<8x1xf32>
        tpu.vector_store %arg9[%c0_22, %c0_23], %33 {strides = array<i32>} : memref<8x1xf32, #tpu.memory_space<vmem>>, vector<8x1xf32>,
        %cst_24 = arith.constant 0.000000e+00 : f32
        %35 = vector.broadcast %cst_24 : f32 to vector<8x1xf32>
        %c0_25 = arith.constant 0 : index
        %c0_26 = arith.constant 0 : index
        %36 = vector.load %arg10[%c0_25, %c0_26] : memref<8x1xf32, #tpu.memory_space<vmem>>, vector<8x1xf32>
        tpu.vector_store %arg10[%c0_25, %c0_26], %35 {strides = array<i32>} : memref<8x1xf32, #tpu.memory_space<vmem>>, vector<8x1xf32>,
      } else {
      }
      %c0 = arith.constant 0 : index
      %c0_6 = arith.constant 0 : index
      %15 = vector.load %arg4[%c0, %c0_6] : memref<8x36xbf16, #tpu.memory_space<vmem>>, vector<8x36xbf16>
      %c0_7 = arith.constant 0 : index
      %c0_8 = arith.constant 0 : index
      %c0_9 = arith.constant 0 : index
      %16 = vector.load %arg3[%c0_7, %c0_8, %c0_9] : memref<1x36x256xbf16, #tpu.memory_space<vmem>>, vector<1x36x256xbf16>
      %17 = vector.shape_cast %16 : vector<1x36x256xbf16> to vector<36x256xbf16>
      %cst = arith.constant dense<0.000000e+00> : vector<8x256xf32>
      %18 = tpu.matmul %15, %17, %cst {dimension_numbers = #tpu.dot_dimension_numbers<[1], [0], [0], [1], [0, 0, 1, 1], [], []>} : vector<8x36xbf16>, vector<36x256xbf16>, vector<8x256xf32> -> vector<8x256xf32>
      %19 = arith.truncf %18 : vector<8x256xf32> to vector<8x256xbf16>
      %c0_10 = arith.constant 0 : index
      %20 = arith.index_cast %3 : i32 to index
      %21 = vector.load %arg8[%c0_10, %20] : memref<8x512xbf16, #tpu.memory_space<vmem>>, vector<8x256xbf16>
      tpu.vector_store %arg8[%c0_10, %20], %19 {strides = array<i32>} : memref<8x512xbf16, #tpu.memory_space<vmem>>, vector<8x256xbf16>,
      %c0_11 = arith.constant 0 : index
      %c0_12 = arith.constant 0 : index
      %22 = vector.load %arg9[%c0_11, %c0_12] : memref<8x1xf32, #tpu.memory_space<vmem>>, vector<8x1xf32>
      %cst_13 = arith.constant dense<0.000000e+00> : vector<8xf32>
      %23 = vector.multi_reduction <add>, %18, %cst_13 [1] : vector<8x256xf32> to vector<8xf32>
      %24 = vector.shape_cast %23 : vector<8xf32> to vector<8x1xf32>
      %25 = arith.addf %22, %24 : vector<8x1xf32>
      %c0_14 = arith.constant 0 : index
      %c0_15 = arith.constant 0 : index
      %26 = vector.load %arg9[%c0_14, %c0_15] : memref<8x1xf32, #tpu.memory_space<vmem>>, vector<8x1xf32>
      tpu.vector_store %arg9[%c0_14, %c0_15], %25 {strides = array<i32>} : memref<8x1xf32, #tpu.memory_space<vmem>>, vector<8x1xf32>,
      %c0_16 = arith.constant 0 : index
      %c0_17 = arith.constant 0 : index
      %27 = vector.load %arg10[%c0_16, %c0_17] : memref<8x1xf32, #tpu.memory_space<vmem>>, vector<8x1xf32>
      %28 = arith.mulf %18, %18 : vector<8x256xf32>
      %cst_18 = arith.constant dense<0.000000e+00> : vector<8xf32>
      %29 = vector.multi_reduction <add>, %28, %cst_18 [1] : vector<8x256xf32> to vector<8xf32>
      %30 = vector.shape_cast %29 : vector<8xf32> to vector<8x1xf32>
      %31 = arith.addf %27, %30 : vector<8x1xf32>
      %c0_19 = arith.constant 0 : index
      %c0_20 = arith.constant 0 : index
      %32 = vector.load %arg10[%c0_19, %c0_20] : memref<8x1xf32, #tpu.memory_space<vmem>>, vector<8x1xf32>
      tpu.vector_store %arg10[%c0_19, %c0_20], %31 {strides = array<i32>} : memref<8x1xf32, #tpu.memory_space<vmem>>, vector<8x1xf32>,
    } else {
    }
    %c1_i32 = arith.constant 1 : i32
    %7 = arith.cmpi eq, %arg0, %c1_i32 : i32
    %8 = arith.extui %7 : i1 to i32
    %c0_i32_2 = arith.constant 0 : i32
    %9 = arith.cmpi ne, %8, %c0_i32_2 : i32
    scf.if %9 {
      %c0 = arith.constant 0 : index
      %c0_3 = arith.constant 0 : index
      %10 = vector.load %arg9[%c0, %c0_3] : memref<8x1xf32, #tpu.memory_space<vmem>>, vector<8x1xf32>
      %cst = arith.constant 0.001953125 : f32
      %11 = vector.broadcast %cst : f32 to vector<8x1xf32>
      %12 = arith.mulf %10, %11 : vector<8x1xf32>
      %c0_4 = arith.constant 0 : index
      %c0_5 = arith.constant 0 : index
      %13 = vector.load %arg10[%c0_4, %c0_5] : memref<8x1xf32, #tpu.memory_space<vmem>>, vector<8x1xf32>
      %cst_6 = arith.constant 0.001953125 : f32
      %14 = vector.broadcast %cst_6 : f32 to vector<8x1xf32>
      %15 = arith.mulf %13, %14 : vector<8x1xf32>
      %16 = arith.mulf %12, %12 : vector<8x1xf32>
      %17 = arith.subf %15, %16 : vector<8x1xf32>
      %cst_7 = arith.constant 0.000000e+00 : f32
      %18 = vector.broadcast %cst_7 : f32 to vector<8x1xf32>
      %19 = arith.maximumf %17, %18 : vector<8x1xf32>
      %c0_8 = arith.constant 0 : index
      %c0_9 = arith.constant 0 : index
      %20 = vector.load %arg5[%c0_8, %c0_9] : memref<8x1xf32, #tpu.memory_space<vmem>>, vector<8x1xf32>
      %cst_10 = arith.constant 9.99999974E-6 : f32
      %21 = vector.broadcast %cst_10 : f32 to vector<8x1xf32>
      %22 = arith.addf %19, %21 : vector<8x1xf32>
      %23 = math.rsqrt %22 : vector<8x1xf32>
      %24 = arith.mulf %20, %23 : vector<8x1xf32>
      %c0_11 = arith.constant 0 : index
      %c0_12 = arith.constant 0 : index
      %25 = vector.load %arg6[%c0_11, %c0_12] : memref<8x1xf32, #tpu.memory_space<vmem>>, vector<8x1xf32>
      %26 = arith.mulf %12, %24 : vector<8x1xf32>
      %27 = arith.subf %25, %26 : vector<8x1xf32>
      %c0_13 = arith.constant 0 : index
      %28 = arith.index_cast %3 : i32 to index
      %29 = vector.load %arg8[%c0_13, %28] : memref<8x512xbf16, #tpu.memory_space<vmem>>, vector<8x256xbf16>
      %30 = arith.extf %29 : vector<8x256xbf16> to vector<8x256xf32>
      %31 = vector.broadcast %24 : vector<8x1xf32> to vector<8x256xf32>
      %32 = arith.mulf %30, %31 : vector<8x256xf32>
      %33 = vector.broadcast %27 : vector<8x1xf32> to vector<8x256xf32>
      %34 = arith.addf %32, %33 : vector<8x256xf32>
      %cst_14 = arith.constant 0.000000e+00 : f32
      %35 = vector.broadcast %cst_14 : f32 to vector<8x256xf32>
      %36 = arith.maximumf %34, %35 : vector<8x256xf32>
      %c0_15 = arith.constant 0 : index
      %c0_16 = arith.constant 0 : index
      %c0_17 = arith.constant 0 : index
      %37 = vector.load %arg7[%c0_15, %c0_16, %c0_17] : memref<1x8x256xf32, #tpu.memory_space<vmem>>, vector<1x8x256xf32>
      %38 = vector.shape_cast %37 : vector<1x8x256xf32> to vector<8x256xf32>
      %39 = vector.shape_cast %36 : vector<8x256xf32> to vector<1x8x256xf32>
      tpu.vector_store %arg7[%c0_15, %c0_16, %c0_17], %39 {strides = array<i32>} : memref<1x8x256xf32, #tpu.memory_space<vmem>>, vector<1x8x256xf32>,
    } else {
    }
    return
  }
  func.func @transform_0(%arg0: i32, %arg1: i32, %arg2: i32) -> (i32, i32, i32) {
    %c1_i32 = arith.constant 1 : i32
    %0 = arith.subi %c1_i32, %arg0 : i32
    %1 = arith.muli %arg1, %0 : i32
    %c1_i32_0 = arith.constant 1 : i32
    %2 = arith.muli %c1_i32_0, %arg0 : i32
    %3 = arith.addi %1, %2 : i32
    %c1_i32_1 = arith.constant 1 : i32
    %4 = arith.subi %c1_i32_1, %arg0 : i32
    %5 = arith.muli %arg2, %4 : i32
    %c0_i32 = arith.constant 0 : i32
    %6 = arith.muli %c0_i32, %arg0 : i32
    %7 = arith.addi %5, %6 : i32
    %c0_i32_2 = arith.constant 0 : i32
    %c0_i32_3 = arith.constant 0 : i32
    return %3, %c0_i32_2, %7 : i32, i32, i32
  }
  func.func @transform_1(%arg0: i32, %arg1: i32, %arg2: i32) -> (i32, i32) {
    %c0_i32 = arith.constant 0 : i32
    %c0_i32_0 = arith.constant 0 : i32
    %c0_i32_1 = arith.constant 0 : i32
    return %c0_i32, %c0_i32_0 : i32, i32
  }
  func.func @transform_2(%arg0: i32, %arg1: i32, %arg2: i32) -> (i32, i32) {
    %c0_i32 = arith.constant 0 : i32
    %c0_i32_0 = arith.constant 0 : i32
    %c0_i32_1 = arith.constant 0 : i32
    return %c0_i32, %c0_i32_0 : i32, i32
  }
  func.func @transform_3(%arg0: i32, %arg1: i32, %arg2: i32) -> (i32, i32) {
    %c0_i32 = arith.constant 0 : i32
    %c0_i32_0 = arith.constant 0 : i32
    %c0_i32_1 = arith.constant 0 : i32
    return %c0_i32, %c0_i32_0 : i32, i32
  }
  func.func @transform_4(%arg0: i32, %arg1: i32, %arg2: i32) -> (i32, i32, i32) {
    %0 = arith.muli %arg1, %arg0 : i32
    %1 = arith.muli %arg2, %arg0 : i32
    %c0_i32 = arith.constant 0 : i32
    %c0_i32_0 = arith.constant 0 : i32
    return %0, %c0_i32, %1 : i32, i32, i32
  }
}

</mosaic_0001>

<llo_original>
// kernel: conv_module_forward.1
$region0: #{conv_module_forward.1}
  #allocation0 [shape = 'u32[]', space=smem, size = 0x4, offset = 0x4, fixed_abs, tag = 'smem constant byte address 0x4 - core index']
  #allocation1 [shape = 'u32[144,128]{1,0:T(1,128)}', space=vmem, size = 0x12000, scoped, tag = 'internal scratch']
  #allocation2 [shape = 'bf16[8,512]{1,0:T(8,128)(2,1)}', space=vmem, size = 0x2000, scoped, tag = 'scratch operand']
  #allocation3 [shape = 'f32[8,1]{1,0:T(8,128)}', space=vmem, size = 0x1000, scoped, tag = 'scratch operand']
  #allocation4 [shape = 'f32[8,1]{1,0:T(8,128)}', space=vmem, size = 0x1000, scoped, tag = 'scratch operand']
  %s0 = inlined_call_operand.vmem [shape: bf16[2,36,256], index: 0, kind: input, shape index: {}]
  %s1 = inlined_call_operand.vmem [shape: bf16[8,36], index: 1, kind: input, shape index: {}]
  %s2 = inlined_call_operand.vmem [shape: f32[8,1], index: 2, kind: input, shape index: {}]
  %s3 = inlined_call_operand.vmem [shape: f32[8,1], index: 3, kind: input, shape index: {}]
  %s4 = inlined_call_operand.vmem [shape: f32[2,8,256], index: 4, kind: output, shape index: {}]
  %s5 = sld [smem:[#allocation0]]
  $region61: #{conv_module_forward.1} parent=0
    _
  %s7 = ssub.s32 1, %s5
  %s8 = scalar_select 0, %s7, %s5
  loop: start=0, step=1, limit=6
  $region2: #{conv_module_forward.1} parent=0 // loop_pre_header
    _
  $region3: #{conv_module_forward.1} parent=0 // loop_header
    %s10 = sphi 0, %s14
    %p11 = scmp.ge.s32.totalorder %s10, 6
    %s17 = sphi 0, %s36
    %s18 = sphi 0, %s32
    %s19 = sphi 0, %s28
    %s20 = sphi 0, %s17
    %s21 = sphi 0, %s18
    %s22 = sphi 0, %s19
    %s23 = sphi 0, %s20
    %s24 = sphi 0, %s21
    %s25 = sphi 0, %s22
    %s49 = sphi 0, %s51
    %s52 = sphi 0, %s49
    %s53 = sphi 0, %s52
    %s69 = sphi 0, %s53
    %s73 = sphi 0, %s73
    %s75 = sphi 0, %s73
    %s76 = sphi 0, %s75
    %s90 = sphi 0, %s76
    %s94 = sphi 0, %s94
    %s96 = sphi 0, %s94
    %s97 = sphi 0, %s96
    %s111 = sphi 0, %s97
    %s115 = sphi 0, %s115
    %s117 = sphi 0, %s115
    %s118 = sphi 0, %s117
    %s132 = sphi 0, %s118
    %s144 = sphi 0, %s146
    %s147 = sphi 0, %s144
    %s148 = sphi 0, %s147
    %s164 = sphi 0, %s148
  $region4: #{conv_module_forward.1} parent=0 // loop_header_branch
    %13 = sbr.rel (%p11) target = $region8
  $region5: #{conv_module_forward.1} parent=0 // loop_body
    %s15 = ssub.s32 %s10, 1
    %s16 = ssub.s32 %s10, 2
    %s26 = sadd.s32 1, %s19
    %p27 = scmp.ge.s32.totalorder %s26, 1
    %s28 = scalar_select %p27, 0, %s26
    %s29 = sadd.s32 1, %s18
    %s30 = scalar_select %p27, %s29, %s18
    %p31 = scmp.ge.s32.totalorder %s30, 2
    %s32 = scalar_select %p31, 0, %s30
    %s33 = sadd.s32 1, %s17
    %s34 = scalar_select %p31, %s33, %s17
    %p35 = scmp.ge.s32.totalorder %s34, 2
    %s36 = scalar_select %p35, 0, %s34
    %s37 = ssub.s32 1, %s17
    %s38 = smul.u32 %s18, %s37
    %s39 = sadd.s32 %s38, %s17
    %s40 = smul.u32 %s19, %s37
    %s41 = ssub.s32 1, %s36
    %s42 = smul.u32 %s32, %s41
    %s43 = sadd.s32 %s42, %s36
    %s44 = smul.u32 %s28, %s41
    %s45 = ssub.s32 %s39, %s43
    %s46 = ssub.s32 %s40, %s44
    %s47 = sor.u32 %s45, %s46
    %p48 = scmp.eq.s32.totalorder %s47, 0
    %s50 = sadd.s32 %s49, 1
    %s51 = scalar_select %p48, %s49, %s50
    %p54 = pneg %p48
    %p55 = scmp.eq.s32.totalorder %s10, 3
    %p56 = por %p54, %p55
    %p57 = scmp.ne.s32.totalorder %s49, %s52
    %p58 = scmp.eq.s32.totalorder %s10, 0
    %p59 = por %p57, %p58
    %p60 = scmp.ne.s32.totalorder %s49, %s52
    %p61 = scmp.eq.s32.totalorder %s15, 3
    %p62 = por %p60, %p61
    %p63 = scmp.ne.s32.totalorder %s52, %s53
    %p64 = scmp.eq.s32.totalorder %s15, 0
    %p65 = por %p63, %p64
    %p66 = scmp.ne.s32.totalorder %s52, %s53
    %p67 = scmp.eq.s32.totalorder %s16, 3
    %p68 = por %p66, %p67
    %p70 = scmp.ne.s32.totalorder %s53, %s69
    %p71 = scmp.eq.s32.totalorder %s16, 0
    %p72 = por %p70, %p71
    %s74 = sadd.s32 %s73, 1
    %p77 = scmp.eq.s32.totalorder %s10, 3
    %p78 = scmp.ne.s32.totalorder %s73, %s75
    %p79 = scmp.eq.s32.totalorder %s10, 0
    %p80 = por %p78, %p79
    %p81 = scmp.ne.s32.totalorder %s73, %s75
    %p82 = scmp.eq.s32.totalorder %s15, 3
    %p83 = por %p81, %p82
    %p84 = scmp.ne.s32.totalorder %s75, %s76
    %p85 = scmp.eq.s32.totalorder %s15, 0
    %p86 = por %p84, %p85
    %p87 = scmp.ne.s32.totalorder %s75, %s76
    %p88 = scmp.eq.s32.totalorder %s16, 3
    %p89 = por %p87, %p88
    %p91 = scmp.ne.s32.totalorder %s76, %s90
    %p92 = scmp.eq.s32.totalorder %s16, 0
    %p93 = por %p91, %p92
    %s95 = sadd.s32 %s94, 1
    %p98 = scmp.eq.s32.totalorder %s10, 3
    %p99 = scmp.ne.s32.totalorder %s94, %s96
    %p100 = scmp.eq.s32.totalorder %s10, 0
    %p101 = por %p99, %p100
    %p102 = scmp.ne.s32.totalorder %s94, %s96
    %p103 = scmp.eq.s32.totalorder %s15, 3
    %p104 = por %p102, %p103
    %p105 = scmp.ne.s32.totalorder %s96, %s97
    %p106 = scmp.eq.s32.totalorder %s15, 0
    %p107 = por %p105, %p106
    %p108 = scmp.ne.s32.totalorder %s96, %s97
    %p109 = scmp.eq.s32.totalorder %s16, 3
    %p110 = por %p108, %p109
    %p112 = scmp.ne.s32.totalorder %s97, %s111
    %p113 = scmp.eq.s32.totalorder %s16, 0
    %p114 = por %p112, %p113
    %s116 = sadd.s32 %s115, 1
    %p119 = scmp.eq.s32.totalorder %s10, 3
    %p120 = scmp.ne.s32.totalorder %s115, %s117
    %p121 = scmp.eq.s32.totalorder %s10, 0
    %p122 = por %p120, %p121
    %p123 = scmp.ne.s32.totalorder %s115, %s117
    %p124 = scmp.eq.s32.totalorder %s15, 3
    %p125 = por %p123, %p124
    %p126 = scmp.ne.s32.totalorder %s117, %s118
    %p127 = scmp.eq.s32.totalorder %s15, 0
    %p128 = por %p126, %p127
    %p129 = scmp.ne.s32.totalorder %s117, %s118
    %p130 = scmp.eq.s32.totalorder %s16, 3
    %p131 = por %p129, %p130
    %p133 = scmp.ne.s32.totalorder %s118, %s132
    %p134 = scmp.eq.s32.totalorder %s16, 0
    %p135 = por %p133, %p134
    %s136 = smul.u32 %s18, %s17
    %s137 = smul.u32 %s19, %s17
    %s138 = smul.u32 %s32, %s36
    %s139 = smul.u32 %s28, %s36
    %s140 = ssub.s32 %s136, %s138
    %s141 = ssub.s32 %s137, %s139
    %s142 = sor.u32 %s140, %s141
    %p143 = scmp.eq.s32.totalorder %s142, 0
    %s145 = sadd.s32 %s144, 1
    %s146 = scalar_select %p143, %s144, %s145
    %p149 = pneg %p143
    %p150 = scmp.eq.s32.totalorder %s10, 3
    %p151 = por %p149, %p150
    %p152 = scmp.ne.s32.totalorder %s144, %s147
    %p153 = scmp.eq.s32.totalorder %s10, 0
    %p154 = por %p152, %p153
    %p155 = scmp.ne.s32.totalorder %s144, %s147
    %p156 = scmp.eq.s32.totalorder %s15, 3
    %p157 = por %p155, %p156
    %p158 = scmp.ne.s32.totalorder %s147, %s148
    %p159 = scmp.eq.s32.totalorder %s15, 0
    %p160 = por %p158, %p159
    %p161 = scmp.ne.s32.totalorder %s147, %s148
    %p162 = scmp.eq.s32.totalorder %s16, 3
    %p163 = por %p161, %p162
    %p165 = scmp.ne.s32.totalorder %s148, %s164
    %p166 = scmp.eq.s32.totalorder %s16, 0
    %p167 = por %p165, %p166
    %p168 = scmp.le.s32.totalorder 1, %s10
    %p169 = scmp.lt.s32.totalorder %s10, 5
    %p170 = pnand %p168, %p169
    %p171 = pneg %p170
    // Predicated region
    $region9: #{conv_module_forward.1} parent=5 // pred_check
      _
    $region10: #{conv_module_forward.1} parent=5 // pred_check_branch
      %173 = sbr.rel (%p170) target = $region12
    $region11: #{conv_module_forward.1} parent=5 // pred_region
      %s174 = ssub.s32 %s10, 1
      // Predicated region
      $region13: #{conv_module_forward.1} parent=11 // pred_check
        %p175 = pneg %p86
      $region14: #{conv_module_forward.1} parent=11 // pred_check_branch
        %177 = sbr.rel (%p175) target = $region16
      $region15: #{conv_module_forward.1} parent=11 // pred_region
        _
      $region16: #{conv_module_forward.1} parent=11 // pred_fallthru
        _
      // Predicated region
      $region17: #{conv_module_forward.1} parent=11 // pred_check
        %p178 = pneg %p107
      $region18: #{conv_module_forward.1} parent=11 // pred_check_branch
        %180 = sbr.rel (%p178) target = $region20
      $region19: #{conv_module_forward.1} parent=11 // pred_region
        _
      $region20: #{conv_module_forward.1} parent=11 // pred_fallthru
        _
      // Predicated region
      $region21: #{conv_module_forward.1} parent=11 // pred_check
        %p181 = pneg %p128
      $region22: #{conv_module_forward.1} parent=11 // pred_check_branch
        %183 = sbr.rel (%p181) target = $region24
      $region23: #{conv_module_forward.1} parent=11 // pred_region
        _
      $region24: #{conv_module_forward.1} parent=11 // pred_fallthru
        _
    $region12: #{conv_module_forward.1} parent=5 // pred_fallthru
      _
    %p184 = scmp.lt.s32.totalorder %s10, 4
    // Predicated region
    $region25: #{conv_module_forward.1} parent=5 // pred_check
      %p185 = pneg %p184
    $region26: #{conv_module_forward.1} parent=5 // pred_check_branch
      %187 = sbr.rel (%p185) target = $region28
    $region27: #{conv_module_forward.1} parent=5 // pred_region
      // Predicated region
      $region29: #{conv_module_forward.1} parent=27 // pred_check
        %p188 = pneg %p59
      $region30: #{conv_module_forward.1} parent=27 // pred_check_branch
        %190 = sbr.rel (%p188) target = $region32
      $region31: #{conv_module_forward.1} parent=27 // pred_region
        %s191 = ssub.s32 1, %s17
        %s192 = smul.u32 %s18, %s191
        %s193 = sadd.s32 %s192, %s17
        %s194 = smul.u32 %s19, %s191
        %s195 = smul.u32 2, %s194
        %p196 = scmp.lt.s32.totalorder %s193, 1
        %s197 = scalar_select %p196, %s193, 1
        %p198 = scmp.lt.s32.totalorder %s195, 1
        %s199 = scalar_select %p198, %s195, 1
        %s200 = smul.addr %s197, 10
        %s201 = sadd.s32 %s199, %s200
        %s202 = smul.addr %s201, 4
        %s203 = scalar_lea.vmem %s0, %s202
        %s204 = ssub.s32 1, %s17
        %s205 = smul.u32 %s18, %s204
        %s206 = sadd.s32 %s205, %s17
        %s207 = smul.u32 %s19, %s204
        %s208 = smul.u32 2, %s207
      $region32: #{conv_module_forward.1} parent=27 // pred_fallthru
        _
    $region28: #{conv_module_forward.1} parent=5 // pred_fallthru
      _
    %p209 = scmp.le.s32.totalorder 1, %s10
    %p210 = scmp.lt.s32.totalorder %s10, 5
    %p211 = pnand %p209, %p210
    %p212 = pneg %p211
    // Predicated region
    $region33: #{conv_module_forward.1} parent=5 // pred_check
      _
    $region34: #{conv_module_forward.1} parent=5 // pred_check_branch
      %214 = sbr.rel (%p211) target = $region36
    $region35: #{conv_module_forward.1} parent=5 // pred_region
      %s215 = ssub.s32 %s10, 1
      %s216 = ssub.s32 1, %s20
      %s217 = smul.u32 %s21, %s216
      %s218 = sadd.s32 %s217, %s20
      %s219 = smul.u32 %s22, %s216
      %s220 = smul.u32 2, %s219
      %p221 = scmp.lt.s32.totalorder %s218, 1
      %s222 = scalar_select %p221, %s218, 1
      %p223 = scmp.lt.s32.totalorder %s220, 1
      %s224 = scalar_select %p223, %s220, 1
      %s225 = smul.addr %s222, 10
      %s226 = sadd.s32 %s224, %s225
      %s227 = smul.addr %s226, 4
      %s228 = scalar_lea.vmem %s0, %s227
      %p229 = pneg %p65
      %p230 = pneg %p62
      %p231 = pneg %p86
      %p232 = pneg %p83
      %p233 = pneg %p107
      %p234 = pneg %p104
      %p235 = pneg %p128
      %p236 = pneg %p125
      %p237 = pneg %p160
      %p238 = pneg %p157
      %s239 = smul.u32 %s21, %s20
      %s240 = smul.u32 %s22, %s20
      %s241 = smul.u32 2, %s240
      %p242 = scmp.lt.s32.totalorder %s239, 1
      %s243 = scalar_select %p242, %s239, 1
      %p244 = scmp.lt.s32.totalorder %s241, 1
      %s245 = scalar_select %p244, %s241, 1
      %s246 = smul.addr %s243, 2
      %s247 = sadd.s32 %s245, %s246
      %s248 = smul.addr %s247, 8
      %s249 = scalar_lea.vmem %s4, %s248
      %s250 = ssub.s32 1, %s20
      %s251 = smul.u32 %s21, %s250
      %s252 = sadd.s32 %s251, %s20
      %s253 = smul.u32 %s22, %s250
      %s254 = smul.u32 2, %s253
      %p255 = scmp.lt.s32.totalorder %s252, 1
      %s256 = scalar_select %p255, %s252, 1
      %p257 = scmp.lt.s32.totalorder %s254, 1
      %s258 = scalar_select %p257, %s254, 1
      %s259 = smul.addr %s256, 10
      %s260 = sadd.s32 %s258, %s259
      %s261 = smul.addr %s260, 4
      %s262 = scalar_lea.vmem %s0, %s261
      %s263 = ssub.s32 1, %s20
      %s264 = smul.u32 %s21, %s263
      %s265 = sadd.s32 %s264, %s20
      %s266 = smul.u32 %s22, %s263
      %s267 = smul.u32 2, %s266
      %s268 = smul.u32 %s21, %s20
      %s269 = smul.u32 %s22, %s20
      %s270 = smul.u32 2, %s269
      %p271 = scmp.lt.s32.totalorder %s268, 1
      %s272 = scalar_select %p271, %s268, 1
      %p273 = scmp.lt.s32.totalorder %s270, 1
      %s274 = scalar_select %p273, %s270, 1
      %s275 = smul.addr %s272, 2
      %s276 = sadd.s32 %s274, %s275
      %s277 = smul.addr %s276, 8
      %s278 = scalar_lea.vmem %s4, %s277
      %s279 = smul.u32 %s21, %s20
      %s280 = smul.u32 %s22, %s20
      %s281 = smul.u32 2, %s280
      %s283 = smul.u32 %s21, 256
      %s284 = smul.u32 %s22, 256
      %s285 = sadd.s32 %s283, %s284
      %p286 = scmp.eq.s32.totalorder %s20, 0
      // Predicated region
      $region37: #{conv_module_forward.1} parent=35 // pred_check
        %p287 = pneg %p286
      $region38: #{conv_module_forward.1} parent=35 // pred_check_branch
        %289 = sbr.rel (%p287) target = $region40
      $region39: #{conv_module_forward.1} parent=35 // pred_region
        %p290 = scmp.eq.s32.totalorder %s21, 0
        %p291 = scmp.eq.s32.totalorder %s22, 0
        %p292 = pnand %p290, %p291
        %p293 = pneg %p292
        // Predicated region
        $region41: #{conv_module_forward.1} parent=39 // pred_check
          _
        $region42: #{conv_module_forward.1} parent=39 // pred_check_branch
          %295 = sbr.rel (%p292) target = $region44
        $region43: #{conv_module_forward.1} parent=39 // pred_region
          %vm296 = vcmask 7168
          %297 = vst.msk [vmem:[#allocation3] sm:$0xff] %vm296, 0.0
          %298 = vst.msk [vmem:[#allocation4] sm:$0xff] %vm296, 0.0
        $region44: #{conv_module_forward.1} parent=39 // pred_fallthru
          _
        %v299 = vld [vmem:[%s1] sm:$0xf]
        %v300 = vld [vmem:[%s262] sm:$0xff]
        %v301 = vld [vmem:[%s262 + $0x8] sm:$0xff]
        %v302 = vld [vmem:[%s262 + $0x10] sm:$0xff]
        %v303 = vld [vmem:[%s262 + $0x18] sm:$0xff]
        %v304 = vld [vmem:[%s262 + $0x20] sm:$0x33]
        %v310 = vunpack.c.l.b16 %v300
        %v311 = vunpack.c.h.b16 %v300
        %v312 = vunpack.c.l.b16 %v301
        %v313 = vunpack.c.h.b16 %v301
        %v314 = vunpack.c.l.b16 %v302
        %v315 = vunpack.c.h.b16 %v302
        %v316 = vunpack.c.l.b16 %v303
        %v317 = vunpack.c.h.b16 %v303
        %v318 = vunpack.c.l.b16 %v304
        %v319 = vunpack.c.h.b16 %v304
        %v320 = vpack.c.b16 %v312, %v310
        %v321 = vpack.c.b16 %v313, %v311
        %v322 = vpack.c.b16 %v316, %v314
        %v323 = vpack.c.b16 %v317, %v315
        %v324 = vpack.c.b16 %v318, %v318
        %v325 = vpack.c.b16 %v319, %v319
        %vm330 = vcmask 293888
        %v332 = vsel %vm330, %v299, 0
        %vm334 = vcmask 1041408
        %v336 = vsel %vm334, %v324, 0
        %v339 = vsel %vm334, %v325, 0
        %341 = vmatprep.subr.bf16.mxu0 %v321
        %342 = vmatpush1.bf16.msra.mxu0 %v320
        %343 = vmatprep.subr.bf16.mxu0 %v323
        %344 = vmatpush1.bf16.msra.mxu0 %v322
        %345 = vmatprep.subr.bf16.mxu0 %v339
        %346 = vmatpush1.bf16.msra.mxu0 %v336
        %347 = vmatprep.subr.bf16.mxu0 0
        %348 = vmatpush1.bf16.msra.mxu0 0
        %349 = vmatprep.subr.bf16.mxu0 0
        %350 = vmatpush1.bf16.msra.mxu0 0
        %351 = vmatprep.subr.bf16.mxu0 0
        %352 = vmatpush1.bf16.msra.mxu0 0
        %353 = vmatprep.subr.bf16.mxu0 0
        %354 = vmatpush1.bf16.msra.mxu0 0
        %355 = vmatprep.subr.bf16.mxu0 0
        %356 = vmatpush1.bf16.msra.mxu0 0
        %357 = vmatprep.subr.bf16.mxu0 0
        %358 = vmatpush1.bf16.msra.mxu0 0
        %359 = vmatprep.subr.bf16.mxu0 0
        %360 = vmatpush1.bf16.msra.mxu0 0
        %361 = vmatprep.subr.bf16.mxu0 0
        %362 = vmatpush1.bf16.msra.mxu0 0
        %363 = vmatprep.subr.bf16.mxu0 0
        %364 = vmatpush1.bf16.msra.mxu0 0
        %365 = vmatprep.subr.bf16.mxu0 0
        %366 = vmatpush1.bf16.msra.mxu0 0
        %367 = vmatprep.subr.bf16.mxu0 0
        %368 = vmatpush1.bf16.msra.mxu0 0
        %369 = vmatprep.subr.bf16.mxu0 0
        %370 = vmatpush1.bf16.msra.mxu0 0
        %371 = vmatprep.subr.bf16.mxu0 0
        %372 = vmatpush1.bf16.msra.mxu0 0
        %373 = vmatprep.mubr.bf16.mxu0 0
        %374 = vmatmul.mubr.bf16.gmra.mrb[0].mxu0 %v332
        %v375 = vpop.f32.mrb[0].mxu0
        %v376 = vadd.f32 0.0, %v375
        %v377 = vpop.f32.mrb[0].mxu0
        %v378 = vadd.f32 0.0, %v377
        %v379 = vpop.f32.mrb[0].mxu0
        %v380 = vpop.f32.mrb[0].mxu0
        %381 = vdwg.mxu0
        %v382 = vpack.c.bf16 %v376, %v376
        %v383 = vpack.c.bf16 %v378, %v378
        %v386 = vunpack.c.l.b16 %v382
        %v387 = vunpack.c.l.b16 %v383
        %v388 = vpack.c.b16 %v387, %v386
        %s390 = sshra.s32 %s285, 7
        %s391 = sand.u32 %s285, 127
        %s392 = smul.addr %s390, 4
        %s393 = scalar_lea.vmem [#allocation2], %s392
        %394 = vst [vmem:[%s393] sm:$0xff] %v388
        %v395 = vld [vmem:[#allocation3] sm:$0xff]
        %v396 = vadd.f32 %v376, %v378
        %397 = vadd.xlane.f32.xlu0 %v396
        %v398 = vpop.xlane.xlu0 %397
        %v399 = vadd.f32 %v395, %v398
        %vm400 = vcmask 7168
        %401 = vst.msk [vmem:[#allocation3] sm:$0xff] %vm400, %v399
        %v402 = vld [vmem:[#allocation4] sm:$0xff]
        %v403 = vmul.f32 %v376, %v376
        %v404 = vmul.f32 %v378, %v378
        %v405 = vadd.f32 %v403, %v404
        %406 = vadd.xlane.f32.xlu0 %v405
        %v407 = vpop.xlane.xlu0 %406
        %v408 = vadd.f32 %v402, %v407
        %409 = vst.msk [vmem:[#allocation4] sm:$0xff] %vm400, %v408
      $region40: #{conv_module_forward.1} parent=35 // pred_fallthru
        _
      %p410 = scmp.eq.s32.totalorder %s20, 1
      // Predicated region
      $region45: #{conv_module_forward.1} parent=35 // pred_check
        %p411 = pneg %p410
      $region46: #{conv_module_forward.1} parent=35 // pred_check_branch
        %413 = sbr.rel (%p411) target = $region48
      $region47: #{conv_module_forward.1} parent=35 // pred_region
        %v414 = vld [vmem:[#allocation3] sm:$0xff]
        %v415 = vmul.f32 %v414, 0.001953125
        %v416 = vld [vmem:[#allocation4] sm:$0xff]
        %v417 = vmul.f32 %v416, 0.001953125
        %v418 = vmul.f32 %v415, %v415
        %v419 = vsub.f32 %v417, %v418
        %v420 = vmax.f32 %v419, 0.0
        %v421 = vld [vmem:[%s2] sm:$0xff]
        %v422 = vadd.f32 %v420, 1e-05
        %v423 = vrsqrt.pop %v422
        %v424 = vmul.f32 %v421, %v423
        %v425 = vld [vmem:[%s3] sm:$0xff]
        %v426 = vmul.f32 %v415, %v424
        %v427 = vsub.f32 %v425, %v426
        %s428 = sshra.s32 %s285, 7
        %s429 = sand.u32 %s285, 127
        %s430 = smul.addr %s428, 4
        %s431 = scalar_lea.vmem [#allocation2], %s430
        %v432 = vld [vmem:[%s431] sm:$0xff]
        %v433 = vunpack.c.l.bf16 %v432
        %v434 = vunpack.c.h.bf16 %v432
        %436 = vset.pattern.permute.xlu0 0
        %437 = vperm.xlu0 %436, %v424
        %v438 = vpop.permute.xlu0 %437
        %v440 = vmul.f32 %v433, %v438
        %v441 = vmul.f32 %v434, %v438
        %443 = vset.pattern.permute.xlu0 0
        %444 = vperm.xlu0 %443, %v427
        %v445 = vpop.permute.xlu0 %444
        %v447 = vadd.f32 %v440, %v445
        %v448 = vadd.f32 %v441, %v445
        %v449 = vmax.f32 %v447, 0.0
        %v450 = vmax.f32 %v448, 0.0
        %451 = vst [vmem:[%s278] sm:$0xff] %v449
        %452 = vst [vmem:[%s278 + $0x8] sm:$0xff] %v450
      $region48: #{conv_module_forward.1} parent=35 // pred_fallthru
        _
      %s453 = smul.u32 %s21, %s20
      %s454 = smul.u32 %s22, %s20
      %s455 = smul.u32 2, %s454
      %p456 = scmp.lt.s32.totalorder %s453, 1
      %s457 = scalar_select %p456, %s453, 1
      %p458 = scmp.lt.s32.totalorder %s455, 1
      %s459 = scalar_select %p458, %s455, 1
      %s460 = smul.addr %s457, 2
      %s461 = sadd.s32 %s459, %s460
      %s462 = smul.addr %s461, 8
      %s463 = scalar_lea.vmem %s4, %s462
      // Predicated region
      $region49: #{conv_module_forward.1} parent=35 // pred_check
        %p464 = pneg %p157
      $region50: #{conv_module_forward.1} parent=35 // pred_check_branch
        %466 = sbr.rel (%p464) target = $region52
      $region51: #{conv_module_forward.1} parent=35 // pred_region
        %s467 = smul.u32 %s21, %s20
        %s468 = smul.u32 %s22, %s20
        %s469 = smul.u32 2, %s468
      $region52: #{conv_module_forward.1} parent=35 // pred_fallthru
        _
    $region36: #{conv_module_forward.1} parent=5 // pred_fallthru
      _
    %p470 = scmp.le.s32.totalorder 2, %s10
    // Predicated region
    $region53: #{conv_module_forward.1} parent=5 // pred_check
      %p471 = pneg %p470
    $region54: #{conv_module_forward.1} parent=5 // pred_check_branch
      %473 = sbr.rel (%p471) target = $region56
    $region55: #{conv_module_forward.1} parent=5 // pred_region
      %s474 = ssub.s32 %s10, 2
      // Predicated region
      $region57: #{conv_module_forward.1} parent=55 // pred_check
        %p475 = pneg %p163
      $region58: #{conv_module_forward.1} parent=55 // pred_check_branch
        %477 = sbr.rel (%p475) target = $region60
      $region59: #{conv_module_forward.1} parent=55 // pred_region
        %s478 = smul.u32 %s24, %s23
        %s479 = smul.u32 %s25, %s23
        %s480 = smul.u32 2, %s479
        %p481 = scmp.lt.s32.totalorder %s478, 1
        %s482 = scalar_select %p481, %s478, 1
        %p483 = scmp.lt.s32.totalorder %s480, 1
        %s484 = scalar_select %p483, %s480, 1
        %s485 = smul.addr %s482, 2
        %s486 = sadd.s32 %s484, %s485
        %s487 = smul.addr %s486, 8
        %s488 = scalar_lea.vmem %s4, %s487
      $region60: #{conv_module_forward.1} parent=55 // pred_fallthru
        _
    $region56: #{conv_module_forward.1} parent=5 // pred_fallthru
      _
  $region6: #{conv_module_forward.1} parent=0 // loop_footer
    %s14 = sadd.s32 1, %s10
  $region7: #{conv_module_forward.1} parent=0 // loop_footer_branch
    %9 = sbr.rel target = $region3
  $region8: #{conv_module_forward.1} parent=0 // loop_exit
    _

</llo_original>
